<compile_context>
chip_gen: v7x
topology: tpu7x:2x2x1
jax: 0.10.0
libtpu: 0.0.40
codegen_flags: <defaults>
</compile_context>

<pallas_src>
import numpy as np

import jax
import jax.numpy as jnp
from jax.experimental import pallas as pl
from jax.experimental.pallas import tpu as pltpu


def build_sign_matrix(n_qubits: int) -> jnp.ndarray:
    """sign[i, j] = +1 if basis state j has equal bits at (2i, 2i+1), else -1.

    Built once on the host (trace-time constant); MSB-first bit ordering,
    matching the PyTorch module's `mask = 2**arange(n_qubits-1, -1, -1)`.
    """
    n_states = 2 ** n_qubits
    states = np.arange(n_states)
    mask = 2 ** np.arange(n_qubits - 1, -1, -1)            # MSB first
    bits = ((states[:, None] & mask[None, :]) != 0).astype(np.float32)
    rows = []
    for i in range(n_qubits // 2):
        eq = bits[:, 2 * i] == bits[:, 2 * i + 1]
        rows.append(np.where(eq, 1.0, -1.0))
    return jnp.asarray(np.stack(rows, axis=0), dtype=jnp.float32)  # (P, S)


def _decode_kernel(x_ref, sign_ref, out_ref):
    """VPU path: out[:, p] = sum_s x[:, s] * sign[p, s] (exact f32)."""
    x = x_ref[...]                                  # (TB, S) f32
    n_pairs = out_ref.shape[1]                      # static (2)
    for p in range(n_pairs):                        # tiny static loop
        sp = sign_ref[p:p + 1, :]                   # (1, S) — sublane-broadcast
        out_ref[:, p:p + 1] = jnp.sum(x * sp, axis=1, keepdims=True)


def decode_layer(x: jnp.ndarray, sign: jnp.ndarray, *, block_rows: int = 512) -> jnp.ndarray:
    """x: (batch, 2**n_qubits); sign: (n_qubits//2, 2**n_qubits) of +/-1."""
    b, s = x.shape
    p = sign.shape[0]
    x = x.astype(jnp.float32)
    sign = sign.astype(jnp.float32)

    # Tiny-batch fast path: pallas_call / grid / DMA overhead would dominate,
    # let XLA fuse the (B,S)x(S,P) contraction into the surrounding graph.
    if b < block_rows:
        return jnp.dot(x, sign.T, precision=jax.lax.Precision.HIGHEST)

    # Pad batch to a multiple of the tile so BlockSpecs stay (8,128)-legal.
    n_tiles = pl.cdiv(b, block_rows)
    padded = n_tiles * block_rows
    if padded != b:
        x = jnp.pad(x, ((0, padded - b), (0, 0)))

    out = pl.pallas_call(
        _decode_kernel,
        out_shape=jax.ShapeDtypeStruct((padded, p), jnp.float32),
        grid=(n_tiles,),
        in_specs=[
            # Stream x in batch tiles (double-buffered by the pipeline).
            pl.BlockSpec((block_rows, s), lambda i: (i, 0)),
            # Sign matrix: constant index_map -> fetched once, VMEM-resident.
            pl.BlockSpec((p, s), lambda i: (0, 0)),
        ],
        out_specs=pl.BlockSpec((block_rows, p), lambda i: (i, 0)),
        compiler_params=pltpu.CompilerParams(
            dimension_semantics=("parallel",),      # shard batch tiles on v7x's 2 TCs
            vmem_limit_bytes=32 * 1024 * 1024,      # safe on v5e/v6e/v7x
        ),
    )(x, sign)

    return out[:b] if padded != b else out


def decode_layer_ref(x: jnp.ndarray, n_qubits: int) -> jnp.ndarray:
    """Pure-JAX reference mirroring the PyTorch gather/sum/diff semantics."""
    n_states = 2 ** n_qubits
    states = np.arange(n_states)
    mask = 2 ** np.arange(n_qubits - 1, -1, -1)
    bits = ((states[:, None] & mask[None, :]) != 0).astype(np.int32)
    cols = []
    for i in range(n_qubits // 2):
        high = [j for j in range(n_states) if bits[j, 2 * i] == bits[j, 2 * i + 1]]
        low = sorted(set(range(n_qubits ** 2)) - set(high))   # module's quirk; == 2**n for n=4
        hx = jnp.take(x, jnp.asarray(high, dtype=jnp.int32), axis=1).sum(axis=1)
        lx = jnp.take(x, jnp.asarray(low, dtype=jnp.int32), axis=1).sum(axis=1)
        cols.append(hx - lx)
    return jnp.stack(cols, axis=1).astype(jnp.float32)


if __name__ == "__main__":
    n_qubits = 4                       # module requires n_qubits in {2, 4}; use 4
    batch = 2048                       # multiple of block_rows -> 4 pipelined tiles
    n_states = 2 ** n_qubits           # 16

    key = jax.random.PRNGKey(0)
    # Synthetic "measurement distribution"-like input, shape (batch, 2**n_qubits).
    x = jax.random.uniform(key, (batch, n_states), dtype=jnp.float32)

    sign = build_sign_matrix(n_qubits)                 # (2, 16), host-precomputed constant

    decode = jax.jit(decode_layer, static_argnames=("block_rows",))
    out = jax.block_until_ready(decode(x, sign, block_rows=512))

    ref = decode_layer_ref(x, n_qubits)
    assert out.shape == (batch, n_qubits // 2)
    assert jnp.allclose(out, ref, atol=1e-5, rtol=1e-5)

    print("KERNEL_OK")
</pallas_src>

<mosaic_0001>
module attributes {stable_mosaic.version = 11 : i64} {
  func.func @_decode_kernel(%arg0: i32, %arg1: memref<512x16xf32, #tpu.memory_space<vmem>>, %arg2: memref<2x16xf32, #tpu.memory_space<vmem>>, %arg3: memref<512x2xf32, #tpu.memory_space<vmem>>) attributes {dimension_semantics = [#tpu.dimension_semantics<parallel>], iteration_bounds = array<i64: 4>, scalar_prefetch = 0 : i64, scratch_operands = 0 : i64, tpu.core_type = #tpu.core_type<tc>, window_params = [{transform_indices = @transform_0, window_bounds = array<i64: 512, 16>}, {pipeline_mode = #tpu.pipeline_mode<synchronous>, transform_indices = @transform_1, window_bounds = array<i64: 2, 16>}, {transform_indices = @transform_2, window_bounds = array<i64: 512, 2>}]} {
    %c0 = arith.constant 0 : index
    %c0_0 = arith.constant 0 : index
    %0 = vector.load %arg1[%c0, %c0_0] : memref<512x16xf32, #tpu.memory_space<vmem>>, vector<512x16xf32>
    %c0_1 = arith.constant 0 : index
    %c0_2 = arith.constant 0 : index
    %1 = vector.load %arg2[%c0_1, %c0_2] : memref<2x16xf32, #tpu.memory_space<vmem>>, vector<1x16xf32>
    %2 = vector.broadcast %1 : vector<1x16xf32> to vector<512x16xf32>
    %3 = arith.mulf %0, %2 : vector<512x16xf32>
    %cst = arith.constant dense<0.000000e+00> : vector<512xf32>
    %4 = vector.multi_reduction <add>, %3, %cst [1] : vector<512x16xf32> to vector<512xf32>
    %5 = vector.shape_cast %4 : vector<512xf32> to vector<512x1xf32>
    %c0_3 = arith.constant 0 : index
    %c0_4 = arith.constant 0 : index
    %6 = vector.load %arg3[%c0_3, %c0_4] : memref<512x2xf32, #tpu.memory_space<vmem>>, vector<512x1xf32>
    tpu.vector_store %arg3[%c0_3, %c0_4], %5 {strides = array<i32>} : memref<512x2xf32, #tpu.memory_space<vmem>>, vector<512x1xf32>,
    %c1 = arith.constant 1 : index
    %c0_5 = arith.constant 0 : index
    %7 = vector.load %arg2[%c1, %c0_5] : memref<2x16xf32, #tpu.memory_space<vmem>>, vector<1x16xf32>
    %8 = vector.broadcast %7 : vector<1x16xf32> to vector<512x16xf32>
    %9 = arith.mulf %0, %8 : vector<512x16xf32>
    %cst_6 = arith.constant dense<0.000000e+00> : vector<512xf32>
    %10 = vector.multi_reduction <add>, %9, %cst_6 [1] : vector<512x16xf32> to vector<512xf32>
    %11 = vector.shape_cast %10 : vector<512xf32> to vector<512x1xf32>
    %c0_7 = arith.constant 0 : index
    %c1_8 = arith.constant 1 : index
    %12 = vector.load %arg3[%c0_7, %c1_8] : memref<512x2xf32, #tpu.memory_space<vmem>>, vector<512x1xf32>
    tpu.vector_store %arg3[%c0_7, %c1_8], %11 {strides = array<i32>} : memref<512x2xf32, #tpu.memory_space<vmem>>, vector<512x1xf32>,
    return
  }
  func.func @transform_0(%arg0: i32) -> (i32, i32) {
    %c0_i32 = arith.constant 0 : i32
    %c0_i32_0 = arith.constant 0 : i32
    return %arg0, %c0_i32 : i32, i32
  }
  func.func @transform_1(%arg0: i32) -> (i32, i32) {
    %c0_i32 = arith.constant 0 : i32
    %c0_i32_0 = arith.constant 0 : i32
    %c0_i32_1 = arith.constant 0 : i32
    return %c0_i32, %c0_i32_0 : i32, i32
  }
  func.func @transform_2(%arg0: i32) -> (i32, i32) {
    %c0_i32 = arith.constant 0 : i32
    %c0_i32_0 = arith.constant 0 : i32
    return %arg0, %c0_i32 : i32, i32
  }
}

</mosaic_0001>

<llo_original>
// kernel: decode_layer.1
$region0: #{decode_layer.1}
  #allocation0 [shape = 'u32[]', space=smem, size = 0x4, offset = 0x4, fixed_abs, tag = 'smem constant byte address 0x4 - core index']
  #allocation1 [shape = 'u32[144,128]{1,0:T(1,128)}', space=vmem, size = 0x12000, scoped, tag = 'internal scratch']
  %s0 = inlined_call_operand.vmem [shape: f32[2048,16], index: 0, kind: input, shape index: {}]
  %s1 = inlined_call_operand.vmem [shape: f32[2,16], index: 1, kind: input, shape index: {}]
  %s2 = inlined_call_operand.vmem [shape: f32[2048,2], index: 2, kind: output, shape index: {}]
  %s3 = sld [smem:[#allocation0]]
  $region41: #{decode_layer.1} parent=0
    _
  %s5 = ssub.s32 1, %s3
  %s6 = scalar_select 0, %s5, %s3
  loop: start=0, step=1, limit=6
  $region2: #{decode_layer.1} parent=0 // loop_pre_header
    _
  $region3: #{decode_layer.1} parent=0 // loop_header
    %s8 = sphi 0, %s12
    %p9 = scmp.ge.s32.totalorder %s8, 6
    %s18 = sphi 0, %s20
    %s21 = sphi 0, %s18
    %s22 = sphi 0, %s21
    %s38 = sphi 0, %s22
    %s42 = sphi 0, %s42
    %s44 = sphi 0, %s42
    %s45 = sphi 0, %s44
    %s59 = sphi 0, %s45
    %s65 = sphi 0, %s67
    %s68 = sphi 0, %s65
    %s69 = sphi 0, %s68
    %s85 = sphi 0, %s69
  $region4: #{decode_layer.1} parent=0 // loop_header_branch
    %11 = sbr.rel (%p9) target = $region8
  $region5: #{decode_layer.1} parent=0 // loop_body
    %s13 = ssub.s32 %s8, 1
    %s14 = ssub.s32 %s8, 2
    %s15 = sadd.s32 %s8, 1
    %s16 = ssub.s32 %s8, %s15
    %p17 = scmp.eq.s32.totalorder %s16, 0
    %s19 = sadd.s32 %s18, 1
    %s20 = scalar_select %p17, %s18, %s19
    %p23 = pneg %p17
    %p24 = scmp.eq.s32.totalorder %s8, 3
    %p25 = por %p23, %p24
    %p26 = scmp.ne.s32.totalorder %s18, %s21
    %p27 = scmp.eq.s32.totalorder %s8, 0
    %p28 = por %p26, %p27
    %p29 = scmp.ne.s32.totalorder %s18, %s21
    %p30 = scmp.eq.s32.totalorder %s13, 3
    %p31 = por %p29, %p30
    %p32 = scmp.ne.s32.totalorder %s21, %s22
    %p33 = scmp.eq.s32.totalorder %s13, 0
    %p34 = por %p32, %p33
    %p35 = scmp.ne.s32.totalorder %s21, %s22
    %p36 = scmp.eq.s32.totalorder %s14, 3
    %p37 = por %p35, %p36
    %p39 = scmp.ne.s32.totalorder %s22, %s38
    %p40 = scmp.eq.s32.totalorder %s14, 0
    %p41 = por %p39, %p40
    %s43 = sadd.s32 %s42, 1
    %p46 = scmp.eq.s32.totalorder %s8, 3
    %p47 = scmp.ne.s32.totalorder %s42, %s44
    %p48 = scmp.eq.s32.totalorder %s8, 0
    %p49 = por %p47, %p48
    %p50 = scmp.ne.s32.totalorder %s42, %s44
    %p51 = scmp.eq.s32.totalorder %s13, 3
    %p52 = por %p50, %p51
    %p53 = scmp.ne.s32.totalorder %s44, %s45
    %p54 = scmp.eq.s32.totalorder %s13, 0
    %p55 = por %p53, %p54
    %p56 = scmp.ne.s32.totalorder %s44, %s45
    %p57 = scmp.eq.s32.totalorder %s14, 3
    %p58 = por %p56, %p57
    %p60 = scmp.ne.s32.totalorder %s45, %s59
    %p61 = scmp.eq.s32.totalorder %s14, 0
    %p62 = por %p60, %p61
    %s63 = ssub.s32 %s8, %s15
    %p64 = scmp.eq.s32.totalorder %s63, 0
    %s66 = sadd.s32 %s65, 1
    %s67 = scalar_select %p64, %s65, %s66
    %p70 = pneg %p64
    %p71 = scmp.eq.s32.totalorder %s8, 3
    %p72 = por %p70, %p71
    %p73 = scmp.ne.s32.totalorder %s65, %s68
    %p74 = scmp.eq.s32.totalorder %s8, 0
    %p75 = por %p73, %p74
    %p76 = scmp.ne.s32.totalorder %s65, %s68
    %p77 = scmp.eq.s32.totalorder %s13, 3
    %p78 = por %p76, %p77
    %p79 = scmp.ne.s32.totalorder %s68, %s69
    %p80 = scmp.eq.s32.totalorder %s13, 0
    %p81 = por %p79, %p80
    %p82 = scmp.ne.s32.totalorder %s68, %s69
    %p83 = scmp.eq.s32.totalorder %s14, 3
    %p84 = por %p82, %p83
    %p86 = scmp.ne.s32.totalorder %s69, %s85
    %p87 = scmp.eq.s32.totalorder %s14, 0
    %p88 = por %p86, %p87
    %p89 = scmp.le.s32.totalorder 1, %s8
    %p90 = scmp.lt.s32.totalorder %s8, 5
    %p91 = pnand %p89, %p90
    %p92 = pneg %p91
    // Predicated region
    $region9: #{decode_layer.1} parent=5 // pred_check
      _
    $region10: #{decode_layer.1} parent=5 // pred_check_branch
      %94 = sbr.rel (%p91) target = $region12
    $region11: #{decode_layer.1} parent=5 // pred_region
      %s95 = ssub.s32 %s8, 1
      // Predicated region
      $region13: #{decode_layer.1} parent=11 // pred_check
        %p96 = pneg %p55
      $region14: #{decode_layer.1} parent=11 // pred_check_branch
        %98 = sbr.rel (%p96) target = $region16
      $region15: #{decode_layer.1} parent=11 // pred_region
        _
      $region16: #{decode_layer.1} parent=11 // pred_fallthru
        _
    $region12: #{decode_layer.1} parent=5 // pred_fallthru
      _
    %p99 = scmp.lt.s32.totalorder %s8, 4
    // Predicated region
    $region17: #{decode_layer.1} parent=5 // pred_check
      %p100 = pneg %p99
    $region18: #{decode_layer.1} parent=5 // pred_check_branch
      %102 = sbr.rel (%p100) target = $region20
    $region19: #{decode_layer.1} parent=5 // pred_region
      // Predicated region
      $region21: #{decode_layer.1} parent=19 // pred_check
        %p103 = pneg %p28
      $region22: #{decode_layer.1} parent=19 // pred_check_branch
        %105 = sbr.rel (%p103) target = $region24
      $region23: #{decode_layer.1} parent=19 // pred_region
        %s106 = smul.u32 64, %s8
        %p107 = scmp.lt.s32.totalorder %s106, 255
        %s108 = scalar_select %p107, %s106, 255
        %s109 = smul.addr %s108, 8
        %s110 = scalar_lea.vmem %s0, %s109
        %s111 = smul.u32 64, %s8
      $region24: #{decode_layer.1} parent=19 // pred_fallthru
        _
    $region20: #{decode_layer.1} parent=5 // pred_fallthru
      _
    %p112 = scmp.le.s32.totalorder 1, %s8
    %p113 = scmp.lt.s32.totalorder %s8, 5
    %p114 = pnand %p112, %p113
    %p115 = pneg %p114
    // Predicated region
    $region25: #{decode_layer.1} parent=5 // pred_check
      _
    $region26: #{decode_layer.1} parent=5 // pred_check_branch
      %117 = sbr.rel (%p114) target = $region28
    $region27: #{decode_layer.1} parent=5 // pred_region
      %s118 = ssub.s32 %s8, 1
      %s119 = smul.u32 64, %s13
      %p120 = scmp.lt.s32.totalorder %s119, 255
      %s121 = scalar_select %p120, %s119, 255
      %s122 = smul.addr %s121, 8
      %s123 = scalar_lea.vmem %s0, %s122
      %p124 = pneg %p34
      %p125 = pneg %p31
      %p126 = pneg %p55
      %p127 = pneg %p52
      %p128 = pneg %p81
      %p129 = pneg %p78
      %s130 = smul.u32 64, %s13
      %p131 = scmp.lt.s32.totalorder %s130, 255
      %s132 = scalar_select %p131, %s130, 255
      %s133 = smul.addr %s132, 8
      %s134 = scalar_lea.vmem %s2, %s133
      %s135 = smul.u32 64, %s13
      %p136 = scmp.lt.s32.totalorder %s135, 255
      %s137 = scalar_select %p136, %s135, 255
      %s138 = smul.addr %s137, 8
      %s139 = scalar_lea.vmem %s0, %s138
      %s140 = smul.u32 64, %s13
      %s141 = smul.u32 64, %s13
      %p142 = scmp.lt.s32.totalorder %s141, 255
      %s143 = scalar_select %p142, %s141, 255
      %s144 = smul.addr %s143, 8
      %s145 = scalar_lea.vmem %s2, %s144
      %s146 = smul.u32 64, %s13
      %v147 = vld [vmem:[%s139] sm:$0xff]
      %v148 = vld [vmem:[%s139 + $0x8] sm:$0xff]
      %v149 = vld [vmem:[%s139 + $0x10] sm:$0xff]
      %v150 = vld [vmem:[%s139 + $0x18] sm:$0xff]
      %v151 = vld [vmem:[%s139 + $0x20] sm:$0xff]
      %v152 = vld [vmem:[%s139 + $0x28] sm:$0xff]
      %v153 = vld [vmem:[%s139 + $0x30] sm:$0xff]
      %v154 = vld [vmem:[%s139 + $0x38] sm:$0xff]
      %v155 = vld [vmem:[%s139 + $0x40] sm:$0xff]
      %v156 = vld [vmem:[%s139 + $0x48] sm:$0xff]
      %v157 = vld [vmem:[%s139 + $0x50] sm:$0xff]
      %v158 = vld [vmem:[%s139 + $0x58] sm:$0xff]
      %v159 = vld [vmem:[%s139 + $0x60] sm:$0xff]
      %v160 = vld [vmem:[%s139 + $0x68] sm:$0xff]
      %v161 = vld [vmem:[%s139 + $0x70] sm:$0xff]
      %v162 = vld [vmem:[%s139 + $0x78] sm:$0xff]
      %v163 = vld [vmem:[%s139 + $0x80] sm:$0xff]
      %v164 = vld [vmem:[%s139 + $0x88] sm:$0xff]
      %v165 = vld [vmem:[%s139 + $0x90] sm:$0xff]
      %v166 = vld [vmem:[%s139 + $0x98] sm:$0xff]
      %v167 = vld [vmem:[%s139 + $0xa0] sm:$0xff]
      %v168 = vld [vmem:[%s139 + $0xa8] sm:$0xff]
      %v169 = vld [vmem:[%s139 + $0xb0] sm:$0xff]
      %v170 = vld [vmem:[%s139 + $0xb8] sm:$0xff]
      %v171 = vld [vmem:[%s139 + $0xc0] sm:$0xff]
      %v172 = vld [vmem:[%s139 + $0xc8] sm:$0xff]
      %v173 = vld [vmem:[%s139 + $0xd0] sm:$0xff]
      %v174 = vld [vmem:[%s139 + $0xd8] sm:$0xff]
      %v175 = vld [vmem:[%s139 + $0xe0] sm:$0xff]
      %v176 = vld [vmem:[%s139 + $0xe8] sm:$0xff]
      %v177 = vld [vmem:[%s139 + $0xf0] sm:$0xff]
      %v178 = vld [vmem:[%s139 + $0xf8] sm:$0xff]
      %v179 = vld [vmem:[%s139 + $0x100] sm:$0xff]
      %v180 = vld [vmem:[%s139 + $0x108] sm:$0xff]
      %v181 = vld [vmem:[%s139 + $0x110] sm:$0xff]
      %v182 = vld [vmem:[%s139 + $0x118] sm:$0xff]
      %v183 = vld [vmem:[%s139 + $0x120] sm:$0xff]
      %v184 = vld [vmem:[%s139 + $0x128] sm:$0xff]
      %v185 = vld [vmem:[%s139 + $0x130] sm:$0xff]
      %v186 = vld [vmem:[%s139 + $0x138] sm:$0xff]
      %v187 = vld [vmem:[%s139 + $0x140] sm:$0xff]
      %v188 = vld [vmem:[%s139 + $0x148] sm:$0xff]
      %v189 = vld [vmem:[%s139 + $0x150] sm:$0xff]
      %v190 = vld [vmem:[%s139 + $0x158] sm:$0xff]
      %v191 = vld [vmem:[%s139 + $0x160] sm:$0xff]
      %v192 = vld [vmem:[%s139 + $0x168] sm:$0xff]
      %v193 = vld [vmem:[%s139 + $0x170] sm:$0xff]
      %v194 = vld [vmem:[%s139 + $0x178] sm:$0xff]
      %v195 = vld [vmem:[%s139 + $0x180] sm:$0xff]
      %v196 = vld [vmem:[%s139 + $0x188] sm:$0xff]
      %v197 = vld [vmem:[%s139 + $0x190] sm:$0xff]
      %v198 = vld [vmem:[%s139 + $0x198] sm:$0xff]
      %v199 = vld [vmem:[%s139 + $0x1a0] sm:$0xff]
      %v200 = vld [vmem:[%s139 + $0x1a8] sm:$0xff]
      %v201 = vld [vmem:[%s139 + $0x1b0] sm:$0xff]
      %v202 = vld [vmem:[%s139 + $0x1b8] sm:$0xff]
      %v203 = vld [vmem:[%s139 + $0x1c0] sm:$0xff]
      %v204 = vld [vmem:[%s139 + $0x1c8] sm:$0xff]
      %v205 = vld [vmem:[%s139 + $0x1d0] sm:$0xff]
      %v206 = vld [vmem:[%s139 + $0x1d8] sm:$0xff]
      %v207 = vld [vmem:[%s139 + $0x1e0] sm:$0xff]
      %v208 = vld [vmem:[%s139 + $0x1e8] sm:$0xff]
      %v209 = vld [vmem:[%s139 + $0x1f0] sm:$0xff]
      %v210 = vld [vmem:[%s139 + $0x1f8] sm:$0xff]
      %v211 = vld [vmem:[%s1] sm:$0x1]
      %v212 = vlaneseq
      %v213 = vshrl.u32 %v212, 7
      %v214 = vsub.s32 0, %v213
      %v215 = vrot.slane %v211, %v214
      %v216 = vmul.f32 %v147, %v215
      %v217 = vmul.f32 %v148, %v215
      %v218 = vmul.f32 %v149, %v215
      %v219 = vmul.f32 %v150, %v215
      %v220 = vmul.f32 %v151, %v215
      %v221 = vmul.f32 %v152, %v215
      %v222 = vmul.f32 %v153, %v215
      %v223 = vmul.f32 %v154, %v215
      %v224 = vmul.f32 %v155, %v215
      %v225 = vmul.f32 %v156, %v215
      %v226 = vmul.f32 %v157, %v215
      %v227 = vmul.f32 %v158, %v215
      %v228 = vmul.f32 %v159, %v215
      %v229 = vmul.f32 %v160, %v215
      %v230 = vmul.f32 %v161, %v215
      %v231 = vmul.f32 %v162, %v215
      %v232 = vmul.f32 %v163, %v215
      %v233 = vmul.f32 %v164, %v215
      %v234 = vmul.f32 %v165, %v215
      %v235 = vmul.f32 %v166, %v215
      %v236 = vmul.f32 %v167, %v215
      %v237 = vmul.f32 %v168, %v215
      %v238 = vmul.f32 %v169, %v215
      %v239 = vmul.f32 %v170, %v215
      %v240 = vmul.f32 %v171, %v215
      %v241 = vmul.f32 %v172, %v215
      %v242 = vmul.f32 %v173, %v215
      %v243 = vmul.f32 %v174, %v215
      %v244 = vmul.f32 %v175, %v215
      %v245 = vmul.f32 %v176, %v215
      %v246 = vmul.f32 %v177, %v215
      %v247 = vmul.f32 %v178, %v215
      %v248 = vmul.f32 %v179, %v215
      %v249 = vmul.f32 %v180, %v215
      %v250 = vmul.f32 %v181, %v215
      %v251 = vmul.f32 %v182, %v215
      %v252 = vmul.f32 %v183, %v215
      %v253 = vmul.f32 %v184, %v215
      %v254 = vmul.f32 %v185, %v215
      %v255 = vmul.f32 %v186, %v215
      %v256 = vmul.f32 %v187, %v215
      %v257 = vmul.f32 %v188, %v215
      %v258 = vmul.f32 %v189, %v215
      %v259 = vmul.f32 %v190, %v215
      %v260 = vmul.f32 %v191, %v215
      %v261 = vmul.f32 %v192, %v215
      %v262 = vmul.f32 %v193, %v215
      %v263 = vmul.f32 %v194, %v215
      %v264 = vmul.f32 %v195, %v215
      %v265 = vmul.f32 %v196, %v215
      %v266 = vmul.f32 %v197, %v215
      %v267 = vmul.f32 %v198, %v215
      %v268 = vmul.f32 %v199, %v215
      %v269 = vmul.f32 %v200, %v215
      %v270 = vmul.f32 %v201, %v215
      %v271 = vmul.f32 %v202, %v215
      %v272 = vmul.f32 %v203, %v215
      %v273 = vmul.f32 %v204, %v215
      %v274 = vmul.f32 %v205, %v215
      %v275 = vmul.f32 %v206, %v215
      %v276 = vmul.f32 %v207, %v215
      %v277 = vmul.f32 %v208, %v215
      %v278 = vmul.f32 %v209, %v215
      %v279 = vmul.f32 %v210, %v215
      %vm280 = vcmask 130048
      %v281 = vsel %vm280, %v216, 0.0
      %282 = vadd.xlane.f32.xlu0 %v281
      %v283 = vpop.xlane.xlu0 %282
      %v284 = vsel %vm280, %v217, 0.0
      %285 = vadd.xlane.f32.xlu0 %v284
      %v286 = vpop.xlane.xlu0 %285
      %v287 = vsel %vm280, %v218, 0.0
      %288 = vadd.xlane.f32.xlu0 %v287
      %v289 = vpop.xlane.xlu0 %288
      %v290 = vsel %vm280, %v219, 0.0
      %291 = vadd.xlane.f32.xlu0 %v290
      %v292 = vpop.xlane.xlu0 %291
      %v293 = vsel %vm280, %v220, 0.0
      %294 = vadd.xlane.f32.xlu0 %v293
      %v295 = vpop.xlane.xlu0 %294
      %v296 = vsel %vm280, %v221, 0.0
      %297 = vadd.xlane.f32.xlu0 %v296
      %v298 = vpop.xlane.xlu0 %297
      %v299 = vsel %vm280, %v222, 0.0
      %300 = vadd.xlane.f32.xlu0 %v299
      %v301 = vpop.xlane.xlu0 %300
      %v302 = vsel %vm280, %v223, 0.0
      %303 = vadd.xlane.f32.xlu0 %v302
      %v304 = vpop.xlane.xlu0 %303
      %v305 = vsel %vm280, %v224, 0.0
      %306 = vadd.xlane.f32.xlu0 %v305
      %v307 = vpop.xlane.xlu0 %306
      %v308 = vsel %vm280, %v225, 0.0
      %309 = vadd.xlane.f32.xlu0 %v308
      %v310 = vpop.xlane.xlu0 %309
      %v311 = vsel %vm280, %v226, 0.0
      %312 = vadd.xlane.f32.xlu0 %v311
      %v313 = vpop.xlane.xlu0 %312
      %v314 = vsel %vm280, %v227, 0.0
      %315 = vadd.xlane.f32.xlu0 %v314
      %v316 = vpop.xlane.xlu0 %315
      %v317 = vsel %vm280, %v228, 0.0
      %318 = vadd.xlane.f32.xlu0 %v317
      %v319 = vpop.xlane.xlu0 %318
      %v320 = vsel %vm280, %v229, 0.0
      %321 = vadd.xlane.f32.xlu0 %v320
      %v322 = vpop.xlane.xlu0 %321
      %v323 = vsel %vm280, %v230, 0.0
      %324 = vadd.xlane.f32.xlu0 %v323
      %v325 = vpop.xlane.xlu0 %324
      %v326 = vsel %vm280, %v231, 0.0
      %327 = vadd.xlane.f32.xlu0 %v326
      %v328 = vpop.xlane.xlu0 %327
      %v329 = vsel %vm280, %v232, 0.0
      %330 = vadd.xlane.f32.xlu0 %v329
      %v331 = vpop.xlane.xlu0 %330
      %v332 = vsel %vm280, %v233, 0.0
      %333 = vadd.xlane.f32.xlu0 %v332
      %v334 = vpop.xlane.xlu0 %333
      %v335 = vsel %vm280, %v234, 0.0
      %336 = vadd.xlane.f32.xlu0 %v335
      %v337 = vpop.xlane.xlu0 %336
      %v338 = vsel %vm280, %v235, 0.0
      %339 = vadd.xlane.f32.xlu0 %v338
      %v340 = vpop.xlane.xlu0 %339
      %v341 = vsel %vm280, %v236, 0.0
      %342 = vadd.xlane.f32.xlu0 %v341
      %v343 = vpop.xlane.xlu0 %342
      %v344 = vsel %vm280, %v237, 0.0
      %345 = vadd.xlane.f32.xlu0 %v344
      %v346 = vpop.xlane.xlu0 %345
      %v347 = vsel %vm280, %v238, 0.0
      %348 = vadd.xlane.f32.xlu0 %v347
      %v349 = vpop.xlane.xlu0 %348
      %v350 = vsel %vm280, %v239, 0.0
      %351 = vadd.xlane.f32.xlu0 %v350
      %v352 = vpop.xlane.xlu0 %351
      %v353 = vsel %vm280, %v240, 0.0
      %354 = vadd.xlane.f32.xlu0 %v353
      %v355 = vpop.xlane.xlu0 %354
      %v356 = vsel %vm280, %v241, 0.0
      %357 = vadd.xlane.f32.xlu0 %v356
      %v358 = vpop.xlane.xlu0 %357
      %v359 = vsel %vm280, %v242, 0.0
      %360 = vadd.xlane.f32.xlu0 %v359
      %v361 = vpop.xlane.xlu0 %360
      %v362 = vsel %vm280, %v243, 0.0
      %363 = vadd.xlane.f32.xlu0 %v362
      %v364 = vpop.xlane.xlu0 %363
      %v365 = vsel %vm280, %v244, 0.0
      %366 = vadd.xlane.f32.xlu0 %v365
      %v367 = vpop.xlane.xlu0 %366
      %v368 = vsel %vm280, %v245, 0.0
      %369 = vadd.xlane.f32.xlu0 %v368
      %v370 = vpop.xlane.xlu0 %369
      %v371 = vsel %vm280, %v246, 0.0
      %372 = vadd.xlane.f32.xlu0 %v371
      %v373 = vpop.xlane.xlu0 %372
      %v374 = vsel %vm280, %v247, 0.0
      %375 = vadd.xlane.f32.xlu0 %v374
      %v376 = vpop.xlane.xlu0 %375
      %v377 = vsel %vm280, %v248, 0.0
      %378 = vadd.xlane.f32.xlu0 %v377
      %v379 = vpop.xlane.xlu0 %378
      %v380 = vsel %vm280, %v249, 0.0
      %381 = vadd.xlane.f32.xlu0 %v380
      %v382 = vpop.xlane.xlu0 %381
      %v383 = vsel %vm280, %v250, 0.0
      %384 = vadd.xlane.f32.xlu0 %v383
      %v385 = vpop.xlane.xlu0 %384
      %v386 = vsel %vm280, %v251, 0.0
      %387 = vadd.xlane.f32.xlu0 %v386
      %v388 = vpop.xlane.xlu0 %387
      %v389 = vsel %vm280, %v252, 0.0
      %390 = vadd.xlane.f32.xlu0 %v389
      %v391 = vpop.xlane.xlu0 %390
      %v392 = vsel %vm280, %v253, 0.0
      %393 = vadd.xlane.f32.xlu0 %v392
      %v394 = vpop.xlane.xlu0 %393
      %v395 = vsel %vm280, %v254, 0.0
      %396 = vadd.xlane.f32.xlu0 %v395
      %v397 = vpop.xlane.xlu0 %396
      %v398 = vsel %vm280, %v255, 0.0
      %399 = vadd.xlane.f32.xlu0 %v398
      %v400 = vpop.xlane.xlu0 %399
      %v401 = vsel %vm280, %v256, 0.0
      %402 = vadd.xlane.f32.xlu0 %v401
      %v403 = vpop.xlane.xlu0 %402
      %v404 = vsel %vm280, %v257, 0.0
      %405 = vadd.xlane.f32.xlu0 %v404
      %v406 = vpop.xlane.xlu0 %405
      %v407 = vsel %vm280, %v258, 0.0
      %408 = vadd.xlane.f32.xlu0 %v407
      %v409 = vpop.xlane.xlu0 %408
      %v410 = vsel %vm280, %v259, 0.0
      %411 = vadd.xlane.f32.xlu0 %v410
      %v412 = vpop.xlane.xlu0 %411
      %v413 = vsel %vm280, %v260, 0.0
      %414 = vadd.xlane.f32.xlu0 %v413
      %v415 = vpop.xlane.xlu0 %414
      %v416 = vsel %vm280, %v261, 0.0
      %417 = vadd.xlane.f32.xlu0 %v416
      %v418 = vpop.xlane.xlu0 %417
      %v419 = vsel %vm280, %v262, 0.0
      %420 = vadd.xlane.f32.xlu0 %v419
      %v421 = vpop.xlane.xlu0 %420
      %v422 = vsel %vm280, %v263, 0.0
      %423 = vadd.xlane.f32.xlu0 %v422
      %v424 = vpop.xlane.xlu0 %423
      %v425 = vsel %vm280, %v264, 0.0
      %426 = vadd.xlane.f32.xlu0 %v425
      %v427 = vpop.xlane.xlu0 %426
      %v428 = vsel %vm280, %v265, 0.0
      %429 = vadd.xlane.f32.xlu0 %v428
      %v430 = vpop.xlane.xlu0 %429
      %v431 = vsel %vm280, %v266, 0.0
      %432 = vadd.xlane.f32.xlu0 %v431
      %v433 = vpop.xlane.xlu0 %432
      %v434 = vsel %vm280, %v267, 0.0
      %435 = vadd.xlane.f32.xlu0 %v434
      %v436 = vpop.xlane.xlu0 %435
      %v437 = vsel %vm280, %v268, 0.0
      %438 = vadd.xlane.f32.xlu0 %v437
      %v439 = vpop.xlane.xlu0 %438
      %v440 = vsel %vm280, %v269, 0.0
      %441 = vadd.xlane.f32.xlu0 %v440
      %v442 = vpop.xlane.xlu0 %441
      %v443 = vsel %vm280, %v270, 0.0
      %444 = vadd.xlane.f32.xlu0 %v443
      %v445 = vpop.xlane.xlu0 %444
      %v446 = vsel %vm280, %v271, 0.0
      %447 = vadd.xlane.f32.xlu0 %v446
      %v448 = vpop.xlane.xlu0 %447
      %v449 = vsel %vm280, %v272, 0.0
      %450 = vadd.xlane.f32.xlu0 %v449
      %v451 = vpop.xlane.xlu0 %450
      %v452 = vsel %vm280, %v273, 0.0
      %453 = vadd.xlane.f32.xlu0 %v452
      %v454 = vpop.xlane.xlu0 %453
      %v455 = vsel %vm280, %v274, 0.0
      %456 = vadd.xlane.f32.xlu0 %v455
      %v457 = vpop.xlane.xlu0 %456
      %v458 = vsel %vm280, %v275, 0.0
      %459 = vadd.xlane.f32.xlu0 %v458
      %v460 = vpop.xlane.xlu0 %459
      %v461 = vsel %vm280, %v276, 0.0
      %462 = vadd.xlane.f32.xlu0 %v461
      %v463 = vpop.xlane.xlu0 %462
      %v464 = vsel %vm280, %v277, 0.0
      %465 = vadd.xlane.f32.xlu0 %v464
      %v466 = vpop.xlane.xlu0 %465
      %v467 = vsel %vm280, %v278, 0.0
      %468 = vadd.xlane.f32.xlu0 %v467
      %v469 = vpop.xlane.xlu0 %468
      %v470 = vsel %vm280, %v279, 0.0
      %471 = vadd.xlane.f32.xlu0 %v470
      %v472 = vpop.xlane.xlu0 %471
      %vm473 = vcmask 7168
      %474 = vst.msk [vmem:[%s145] sm:$0xff] %vm473, %v283
      %475 = vst.msk [vmem:[%s145 + $0x8] sm:$0xff] %vm473, %v286
      %476 = vst.msk [vmem:[%s145 + $0x10] sm:$0xff] %vm473, %v289
      %477 = vst.msk [vmem:[%s145 + $0x18] sm:$0xff] %vm473, %v292
      %478 = vst.msk [vmem:[%s145 + $0x20] sm:$0xff] %vm473, %v295
      %479 = vst.msk [vmem:[%s145 + $0x28] sm:$0xff] %vm473, %v298
      %480 = vst.msk [vmem:[%s145 + $0x30] sm:$0xff] %vm473, %v301
      %481 = vst.msk [vmem:[%s145 + $0x38] sm:$0xff] %vm473, %v304
      %482 = vst.msk [vmem:[%s145 + $0x40] sm:$0xff] %vm473, %v307
      %483 = vst.msk [vmem:[%s145 + $0x48] sm:$0xff] %vm473, %v310
      %484 = vst.msk [vmem:[%s145 + $0x50] sm:$0xff] %vm473, %v313
      %485 = vst.msk [vmem:[%s145 + $0x58] sm:$0xff] %vm473, %v316
      %486 = vst.msk [vmem:[%s145 + $0x60] sm:$0xff] %vm473, %v319
      %487 = vst.msk [vmem:[%s145 + $0x68] sm:$0xff] %vm473, %v322
      %488 = vst.msk [vmem:[%s145 + $0x70] sm:$0xff] %vm473, %v325
      %489 = vst.msk [vmem:[%s145 + $0x78] sm:$0xff] %vm473, %v328
      %490 = vst.msk [vmem:[%s145 + $0x80] sm:$0xff] %vm473, %v331
      %491 = vst.msk [vmem:[%s145 + $0x88] sm:$0xff] %vm473, %v334
      %492 = vst.msk [vmem:[%s145 + $0x90] sm:$0xff] %vm473, %v337
      %493 = vst.msk [vmem:[%s145 + $0x98] sm:$0xff] %vm473, %v340
      %494 = vst.msk [vmem:[%s145 + $0xa0] sm:$0xff] %vm473, %v343
      %495 = vst.msk [vmem:[%s145 + $0xa8] sm:$0xff] %vm473, %v346
      %496 = vst.msk [vmem:[%s145 + $0xb0] sm:$0xff] %vm473, %v349
      %497 = vst.msk [vmem:[%s145 + $0xb8] sm:$0xff] %vm473, %v352
      %498 = vst.msk [vmem:[%s145 + $0xc0] sm:$0xff] %vm473, %v355
      %499 = vst.msk [vmem:[%s145 + $0xc8] sm:$0xff] %vm473, %v358
      %500 = vst.msk [vmem:[%s145 + $0xd0] sm:$0xff] %vm473, %v361
      %501 = vst.msk [vmem:[%s145 + $0xd8] sm:$0xff] %vm473, %v364
      %502 = vst.msk [vmem:[%s145 + $0xe0] sm:$0xff] %vm473, %v367
      %503 = vst.msk [vmem:[%s145 + $0xe8] sm:$0xff] %vm473, %v370
      %504 = vst.msk [vmem:[%s145 + $0xf0] sm:$0xff] %vm473, %v373
      %505 = vst.msk [vmem:[%s145 + $0xf8] sm:$0xff] %vm473, %v376
      %506 = vst.msk [vmem:[%s145 + $0x100] sm:$0xff] %vm473, %v379
      %507 = vst.msk [vmem:[%s145 + $0x108] sm:$0xff] %vm473, %v382
      %508 = vst.msk [vmem:[%s145 + $0x110] sm:$0xff] %vm473, %v385
      %509 = vst.msk [vmem:[%s145 + $0x118] sm:$0xff] %vm473, %v388
      %510 = vst.msk [vmem:[%s145 + $0x120] sm:$0xff] %vm473, %v391
      %511 = vst.msk [vmem:[%s145 + $0x128] sm:$0xff] %vm473, %v394
      %512 = vst.msk [vmem:[%s145 + $0x130] sm:$0xff] %vm473, %v397
      %513 = vst.msk [vmem:[%s145 + $0x138] sm:$0xff] %vm473, %v400
      %514 = vst.msk [vmem:[%s145 + $0x140] sm:$0xff] %vm473, %v403
      %515 = vst.msk [vmem:[%s145 + $0x148] sm:$0xff] %vm473, %v406
      %516 = vst.msk [vmem:[%s145 + $0x150] sm:$0xff] %vm473, %v409
      %517 = vst.msk [vmem:[%s145 + $0x158] sm:$0xff] %vm473, %v412
      %518 = vst.msk [vmem:[%s145 + $0x160] sm:$0xff] %vm473, %v415
      %519 = vst.msk [vmem:[%s145 + $0x168] sm:$0xff] %vm473, %v418
      %520 = vst.msk [vmem:[%s145 + $0x170] sm:$0xff] %vm473, %v421
      %521 = vst.msk [vmem:[%s145 + $0x178] sm:$0xff] %vm473, %v424
      %522 = vst.msk [vmem:[%s145 + $0x180] sm:$0xff] %vm473, %v427
      %523 = vst.msk [vmem:[%s145 + $0x188] sm:$0xff] %vm473, %v430
      %524 = vst.msk [vmem:[%s145 + $0x190] sm:$0xff] %vm473, %v433
      %525 = vst.msk [vmem:[%s145 + $0x198] sm:$0xff] %vm473, %v436
      %526 = vst.msk [vmem:[%s145 + $0x1a0] sm:$0xff] %vm473, %v439
      %527 = vst.msk [vmem:[%s145 + $0x1a8] sm:$0xff] %vm473, %v442
      %528 = vst.msk [vmem:[%s145 + $0x1b0] sm:$0xff] %vm473, %v445
      %529 = vst.msk [vmem:[%s145 + $0x1b8] sm:$0xff] %vm473, %v448
      %530 = vst.msk [vmem:[%s145 + $0x1c0] sm:$0xff] %vm473, %v451
      %531 = vst.msk [vmem:[%s145 + $0x1c8] sm:$0xff] %vm473, %v454
      %532 = vst.msk [vmem:[%s145 + $0x1d0] sm:$0xff] %vm473, %v457
      %533 = vst.msk [vmem:[%s145 + $0x1d8] sm:$0xff] %vm473, %v460
      %534 = vst.msk [vmem:[%s145 + $0x1e0] sm:$0xff] %vm473, %v463
      %535 = vst.msk [vmem:[%s145 + $0x1e8] sm:$0xff] %vm473, %v466
      %536 = vst.msk [vmem:[%s145 + $0x1f0] sm:$0xff] %vm473, %v469
      %537 = vst.msk [vmem:[%s145 + $0x1f8] sm:$0xff] %vm473, %v472
      %v538 = vld [vmem:[%s1 + $0x1] sm:$0x1]
      %v539 = vlaneseq
      %v540 = vshrl.u32 %v539, 7
      %v541 = vsub.s32 0, %v540
      %v542 = vrot.slane %v538, %v541
      %v543 = vmul.f32 %v147, %v542
      %v544 = vmul.f32 %v148, %v542
      %v545 = vmul.f32 %v149, %v542
      %v546 = vmul.f32 %v150, %v542
      %v547 = vmul.f32 %v151, %v542
      %v548 = vmul.f32 %v152, %v542
      %v549 = vmul.f32 %v153, %v542
      %v550 = vmul.f32 %v154, %v542
      %v551 = vmul.f32 %v155, %v542
      %v552 = vmul.f32 %v156, %v542
      %v553 = vmul.f32 %v157, %v542
      %v554 = vmul.f32 %v158, %v542
      %v555 = vmul.f32 %v159, %v542
      %v556 = vmul.f32 %v160, %v542
      %v557 = vmul.f32 %v161, %v542
      %v558 = vmul.f32 %v162, %v542
      %v559 = vmul.f32 %v163, %v542
      %v560 = vmul.f32 %v164, %v542
      %v561 = vmul.f32 %v165, %v542
      %v562 = vmul.f32 %v166, %v542
      %v563 = vmul.f32 %v167, %v542
      %v564 = vmul.f32 %v168, %v542
      %v565 = vmul.f32 %v169, %v542
      %v566 = vmul.f32 %v170, %v542
      %v567 = vmul.f32 %v171, %v542
      %v568 = vmul.f32 %v172, %v542
      %v569 = vmul.f32 %v173, %v542
      %v570 = vmul.f32 %v174, %v542
      %v571 = vmul.f32 %v175, %v542
      %v572 = vmul.f32 %v176, %v542
      %v573 = vmul.f32 %v177, %v542
      %v574 = vmul.f32 %v178, %v542
      %v575 = vmul.f32 %v179, %v542
      %v576 = vmul.f32 %v180, %v542
      %v577 = vmul.f32 %v181, %v542
      %v578 = vmul.f32 %v182, %v542
      %v579 = vmul.f32 %v183, %v542
      %v580 = vmul.f32 %v184, %v542
      %v581 = vmul.f32 %v185, %v542
      %v582 = vmul.f32 %v186, %v542
      %v583 = vmul.f32 %v187, %v542
      %v584 = vmul.f32 %v188, %v542
      %v585 = vmul.f32 %v189, %v542
      %v586 = vmul.f32 %v190, %v542
      %v587 = vmul.f32 %v191, %v542
      %v588 = vmul.f32 %v192, %v542
      %v589 = vmul.f32 %v193, %v542
      %v590 = vmul.f32 %v194, %v542
      %v591 = vmul.f32 %v195, %v542
      %v592 = vmul.f32 %v196, %v542
      %v593 = vmul.f32 %v197, %v542
      %v594 = vmul.f32 %v198, %v542
      %v595 = vmul.f32 %v199, %v542
      %v596 = vmul.f32 %v200, %v542
      %v597 = vmul.f32 %v201, %v542
      %v598 = vmul.f32 %v202, %v542
      %v599 = vmul.f32 %v203, %v542
      %v600 = vmul.f32 %v204, %v542
      %v601 = vmul.f32 %v205, %v542
      %v602 = vmul.f32 %v206, %v542
      %v603 = vmul.f32 %v207, %v542
      %v604 = vmul.f32 %v208, %v542
      %v605 = vmul.f32 %v209, %v542
      %v606 = vmul.f32 %v210, %v542
      %v607 = vsel %vm280, %v543, 0.0
      %608 = vadd.xlane.f32.xlu0 %v607
      %v609 = vpop.xlane.xlu0 %608
      %v610 = vsel %vm280, %v544, 0.0
      %611 = vadd.xlane.f32.xlu0 %v610
      %v612 = vpop.xlane.xlu0 %611
      %v613 = vsel %vm280, %v545, 0.0
      %614 = vadd.xlane.f32.xlu0 %v613
      %v615 = vpop.xlane.xlu0 %614
      %v616 = vsel %vm280, %v546, 0.0
      %617 = vadd.xlane.f32.xlu0 %v616
      %v618 = vpop.xlane.xlu0 %617
      %v619 = vsel %vm280, %v547, 0.0
      %620 = vadd.xlane.f32.xlu0 %v619
      %v621 = vpop.xlane.xlu0 %620
      %v622 = vsel %vm280, %v548, 0.0
      %623 = vadd.xlane.f32.xlu0 %v622
      %v624 = vpop.xlane.xlu0 %623
      %v625 = vsel %vm280, %v549, 0.0
      %626 = vadd.xlane.f32.xlu0 %v625
      %v627 = vpop.xlane.xlu0 %626
      %v628 = vsel %vm280, %v550, 0.0
      %629 = vadd.xlane.f32.xlu0 %v628
      %v630 = vpop.xlane.xlu0 %629
      %v631 = vsel %vm280, %v551, 0.0
      %632 = vadd.xlane.f32.xlu0 %v631
      %v633 = vpop.xlane.xlu0 %632
      %v634 = vsel %vm280, %v552, 0.0
      %635 = vadd.xlane.f32.xlu0 %v634
      %v636 = vpop.xlane.xlu0 %635
      %v637 = vsel %vm280, %v553, 0.0
      %638 = vadd.xlane.f32.xlu0 %v637
      %v639 = vpop.xlane.xlu0 %638
      %v640 = vsel %vm280, %v554, 0.0
      %641 = vadd.xlane.f32.xlu0 %v640
      %v642 = vpop.xlane.xlu0 %641
      %v643 = vsel %vm280, %v555, 0.0
      %644 = vadd.xlane.f32.xlu0 %v643
      %v645 = vpop.xlane.xlu0 %644
      %v646 = vsel %vm280, %v556, 0.0
      %647 = vadd.xlane.f32.xlu0 %v646
      %v648 = vpop.xlane.xlu0 %647
      %v649 = vsel %vm280, %v557, 0.0
      %650 = vadd.xlane.f32.xlu0 %v649
      %v651 = vpop.xlane.xlu0 %650
      %v652 = vsel %vm280, %v558, 0.0
      %653 = vadd.xlane.f32.xlu0 %v652
      %v654 = vpop.xlane.xlu0 %653
      %v655 = vsel %vm280, %v559, 0.0
      %656 = vadd.xlane.f32.xlu0 %v655
      %v657 = vpop.xlane.xlu0 %656
      %v658 = vsel %vm280, %v560, 0.0
      %659 = vadd.xlane.f32.xlu0 %v658
      %v660 = vpop.xlane.xlu0 %659
      %v661 = vsel %vm280, %v561, 0.0
      %662 = vadd.xlane.f32.xlu0 %v661
      %v663 = vpop.xlane.xlu0 %662
      %v664 = vsel %vm280, %v562, 0.0
      %665 = vadd.xlane.f32.xlu0 %v664
      %v666 = vpop.xlane.xlu0 %665
      %v667 = vsel %vm280, %v563, 0.0
      %668 = vadd.xlane.f32.xlu0 %v667
      %v669 = vpop.xlane.xlu0 %668
      %v670 = vsel %vm280, %v564, 0.0
      %671 = vadd.xlane.f32.xlu0 %v670
      %v672 = vpop.xlane.xlu0 %671
      %v673 = vsel %vm280, %v565, 0.0
      %674 = vadd.xlane.f32.xlu0 %v673
      %v675 = vpop.xlane.xlu0 %674
      %v676 = vsel %vm280, %v566, 0.0
      %677 = vadd.xlane.f32.xlu0 %v676
      %v678 = vpop.xlane.xlu0 %677
      %v679 = vsel %vm280, %v567, 0.0
      %680 = vadd.xlane.f32.xlu0 %v679
      %v681 = vpop.xlane.xlu0 %680
      %v682 = vsel %vm280, %v568, 0.0
      %683 = vadd.xlane.f32.xlu0 %v682
      %v684 = vpop.xlane.xlu0 %683
      %v685 = vsel %vm280, %v569, 0.0
      %686 = vadd.xlane.f32.xlu0 %v685
      %v687 = vpop.xlane.xlu0 %686
      %v688 = vsel %vm280, %v570, 0.0
      %689 = vadd.xlane.f32.xlu0 %v688
      %v690 = vpop.xlane.xlu0 %689
      %v691 = vsel %vm280, %v571, 0.0
      %692 = vadd.xlane.f32.xlu0 %v691
      %v693 = vpop.xlane.xlu0 %692
      %v694 = vsel %vm280, %v572, 0.0
      %695 = vadd.xlane.f32.xlu0 %v694
      %v696 = vpop.xlane.xlu0 %695
      %v697 = vsel %vm280, %v573, 0.0
      %698 = vadd.xlane.f32.xlu0 %v697
      %v699 = vpop.xlane.xlu0 %698
      %v700 = vsel %vm280, %v574, 0.0
      %701 = vadd.xlane.f32.xlu0 %v700
      %v702 = vpop.xlane.xlu0 %701
      %v703 = vsel %vm280, %v575, 0.0
      %704 = vadd.xlane.f32.xlu0 %v703
      %v705 = vpop.xlane.xlu0 %704
      %v706 = vsel %vm280, %v576, 0.0
      %707 = vadd.xlane.f32.xlu0 %v706
      %v708 = vpop.xlane.xlu0 %707
      %v709 = vsel %vm280, %v577, 0.0
      %710 = vadd.xlane.f32.xlu0 %v709
      %v711 = vpop.xlane.xlu0 %710
      %v712 = vsel %vm280, %v578, 0.0
      %713 = vadd.xlane.f32.xlu0 %v712
      %v714 = vpop.xlane.xlu0 %713
      %v715 = vsel %vm280, %v579, 0.0
      %716 = vadd.xlane.f32.xlu0 %v715
      %v717 = vpop.xlane.xlu0 %716
      %v718 = vsel %vm280, %v580, 0.0
      %719 = vadd.xlane.f32.xlu0 %v718
      %v720 = vpop.xlane.xlu0 %719
      %v721 = vsel %vm280, %v581, 0.0
      %722 = vadd.xlane.f32.xlu0 %v721
      %v723 = vpop.xlane.xlu0 %722
      %v724 = vsel %vm280, %v582, 0.0
      %725 = vadd.xlane.f32.xlu0 %v724
      %v726 = vpop.xlane.xlu0 %725
      %v727 = vsel %vm280, %v583, 0.0
      %728 = vadd.xlane.f32.xlu0 %v727
      %v729 = vpop.xlane.xlu0 %728
      %v730 = vsel %vm280, %v584, 0.0
      %731 = vadd.xlane.f32.xlu0 %v730
      %v732 = vpop.xlane.xlu0 %731
      %v733 = vsel %vm280, %v585, 0.0
      %734 = vadd.xlane.f32.xlu0 %v733
      %v735 = vpop.xlane.xlu0 %734
      %v736 = vsel %vm280, %v586, 0.0
      %737 = vadd.xlane.f32.xlu0 %v736
      %v738 = vpop.xlane.xlu0 %737
      %v739 = vsel %vm280, %v587, 0.0
      %740 = vadd.xlane.f32.xlu0 %v739
      %v741 = vpop.xlane.xlu0 %740
      %v742 = vsel %vm280, %v588, 0.0
      %743 = vadd.xlane.f32.xlu0 %v742
      %v744 = vpop.xlane.xlu0 %743
      %v745 = vsel %vm280, %v589, 0.0
      %746 = vadd.xlane.f32.xlu0 %v745
      %v747 = vpop.xlane.xlu0 %746
      %v748 = vsel %vm280, %v590, 0.0
      %749 = vadd.xlane.f32.xlu0 %v748
      %v750 = vpop.xlane.xlu0 %749
      %v751 = vsel %vm280, %v591, 0.0
      %752 = vadd.xlane.f32.xlu0 %v751
      %v753 = vpop.xlane.xlu0 %752
      %v754 = vsel %vm280, %v592, 0.0
      %755 = vadd.xlane.f32.xlu0 %v754
      %v756 = vpop.xlane.xlu0 %755
      %v757 = vsel %vm280, %v593, 0.0
      %758 = vadd.xlane.f32.xlu0 %v757
      %v759 = vpop.xlane.xlu0 %758
      %v760 = vsel %vm280, %v594, 0.0
      %761 = vadd.xlane.f32.xlu0 %v760
      %v762 = vpop.xlane.xlu0 %761
      %v763 = vsel %vm280, %v595, 0.0
      %764 = vadd.xlane.f32.xlu0 %v763
      %v765 = vpop.xlane.xlu0 %764
      %v766 = vsel %vm280, %v596, 0.0
      %767 = vadd.xlane.f32.xlu0 %v766
      %v768 = vpop.xlane.xlu0 %767
      %v769 = vsel %vm280, %v597, 0.0
      %770 = vadd.xlane.f32.xlu0 %v769
      %v771 = vpop.xlane.xlu0 %770
      %v772 = vsel %vm280, %v598, 0.0
      %773 = vadd.xlane.f32.xlu0 %v772
      %v774 = vpop.xlane.xlu0 %773
      %v775 = vsel %vm280, %v599, 0.0
      %776 = vadd.xlane.f32.xlu0 %v775
      %v777 = vpop.xlane.xlu0 %776
      %v778 = vsel %vm280, %v600, 0.0
      %779 = vadd.xlane.f32.xlu0 %v778
      %v780 = vpop.xlane.xlu0 %779
      %v781 = vsel %vm280, %v601, 0.0
      %782 = vadd.xlane.f32.xlu0 %v781
      %v783 = vpop.xlane.xlu0 %782
      %v784 = vsel %vm280, %v602, 0.0
      %785 = vadd.xlane.f32.xlu0 %v784
      %v786 = vpop.xlane.xlu0 %785
      %v787 = vsel %vm280, %v603, 0.0
      %788 = vadd.xlane.f32.xlu0 %v787
      %v789 = vpop.xlane.xlu0 %788
      %v790 = vsel %vm280, %v604, 0.0
      %791 = vadd.xlane.f32.xlu0 %v790
      %v792 = vpop.xlane.xlu0 %791
      %v793 = vsel %vm280, %v605, 0.0
      %794 = vadd.xlane.f32.xlu0 %v793
      %v795 = vpop.xlane.xlu0 %794
      %v796 = vsel %vm280, %v606, 0.0
      %797 = vadd.xlane.f32.xlu0 %v796
      %v798 = vpop.xlane.xlu0 %797
      %vm799 = vcmask 15368
      %800 = vst.msk [vmem:[%s145] sm:$0xff] %vm799, %v609
      %801 = vst.msk [vmem:[%s145 + $0x8] sm:$0xff] %vm799, %v612
      %802 = vst.msk [vmem:[%s145 + $0x10] sm:$0xff] %vm799, %v615
      %803 = vst.msk [vmem:[%s145 + $0x18] sm:$0xff] %vm799, %v618
      %804 = vst.msk [vmem:[%s145 + $0x20] sm:$0xff] %vm799, %v621
      %805 = vst.msk [vmem:[%s145 + $0x28] sm:$0xff] %vm799, %v624
      %806 = vst.msk [vmem:[%s145 + $0x30] sm:$0xff] %vm799, %v627
      %807 = vst.msk [vmem:[%s145 + $0x38] sm:$0xff] %vm799, %v630
      %808 = vst.msk [vmem:[%s145 + $0x40] sm:$0xff] %vm799, %v633
      %809 = vst.msk [vmem:[%s145 + $0x48] sm:$0xff] %vm799, %v636
      %810 = vst.msk [vmem:[%s145 + $0x50] sm:$0xff] %vm799, %v639
      %811 = vst.msk [vmem:[%s145 + $0x58] sm:$0xff] %vm799, %v642
      %812 = vst.msk [vmem:[%s145 + $0x60] sm:$0xff] %vm799, %v645
      %813 = vst.msk [vmem:[%s145 + $0x68] sm:$0xff] %vm799, %v648
      %814 = vst.msk [vmem:[%s145 + $0x70] sm:$0xff] %vm799, %v651
      %815 = vst.msk [vmem:[%s145 + $0x78] sm:$0xff] %vm799, %v654
      %816 = vst.msk [vmem:[%s145 + $0x80] sm:$0xff] %vm799, %v657
      %817 = vst.msk [vmem:[%s145 + $0x88] sm:$0xff] %vm799, %v660
      %818 = vst.msk [vmem:[%s145 + $0x90] sm:$0xff] %vm799, %v663
      %819 = vst.msk [vmem:[%s145 + $0x98] sm:$0xff] %vm799, %v666
      %820 = vst.msk [vmem:[%s145 + $0xa0] sm:$0xff] %vm799, %v669
      %821 = vst.msk [vmem:[%s145 + $0xa8] sm:$0xff] %vm799, %v672
      %822 = vst.msk [vmem:[%s145 + $0xb0] sm:$0xff] %vm799, %v675
      %823 = vst.msk [vmem:[%s145 + $0xb8] sm:$0xff] %vm799, %v678
      %824 = vst.msk [vmem:[%s145 + $0xc0] sm:$0xff] %vm799, %v681
      %825 = vst.msk [vmem:[%s145 + $0xc8] sm:$0xff] %vm799, %v684
      %826 = vst.msk [vmem:[%s145 + $0xd0] sm:$0xff] %vm799, %v687
      %827 = vst.msk [vmem:[%s145 + $0xd8] sm:$0xff] %vm799, %v690
      %828 = vst.msk [vmem:[%s145 + $0xe0] sm:$0xff] %vm799, %v693
      %829 = vst.msk [vmem:[%s145 + $0xe8] sm:$0xff] %vm799, %v696
      %830 = vst.msk [vmem:[%s145 + $0xf0] sm:$0xff] %vm799, %v699
      %831 = vst.msk [vmem:[%s145 + $0xf8] sm:$0xff] %vm799, %v702
      %832 = vst.msk [vmem:[%s145 + $0x100] sm:$0xff] %vm799, %v705
      %833 = vst.msk [vmem:[%s145 + $0x108] sm:$0xff] %vm799, %v708
      %834 = vst.msk [vmem:[%s145 + $0x110] sm:$0xff] %vm799, %v711
      %835 = vst.msk [vmem:[%s145 + $0x118] sm:$0xff] %vm799, %v714
      %836 = vst.msk [vmem:[%s145 + $0x120] sm:$0xff] %vm799, %v717
      %837 = vst.msk [vmem:[%s145 + $0x128] sm:$0xff] %vm799, %v720
      %838 = vst.msk [vmem:[%s145 + $0x130] sm:$0xff] %vm799, %v723
      %839 = vst.msk [vmem:[%s145 + $0x138] sm:$0xff] %vm799, %v726
      %840 = vst.msk [vmem:[%s145 + $0x140] sm:$0xff] %vm799, %v729
      %841 = vst.msk [vmem:[%s145 + $0x148] sm:$0xff] %vm799, %v732
      %842 = vst.msk [vmem:[%s145 + $0x150] sm:$0xff] %vm799, %v735
      %843 = vst.msk [vmem:[%s145 + $0x158] sm:$0xff] %vm799, %v738
      %844 = vst.msk [vmem:[%s145 + $0x160] sm:$0xff] %vm799, %v741
      %845 = vst.msk [vmem:[%s145 + $0x168] sm:$0xff] %vm799, %v744
      %846 = vst.msk [vmem:[%s145 + $0x170] sm:$0xff] %vm799, %v747
      %847 = vst.msk [vmem:[%s145 + $0x178] sm:$0xff] %vm799, %v750
      %848 = vst.msk [vmem:[%s145 + $0x180] sm:$0xff] %vm799, %v753
      %849 = vst.msk [vmem:[%s145 + $0x188] sm:$0xff] %vm799, %v756
      %850 = vst.msk [vmem:[%s145 + $0x190] sm:$0xff] %vm799, %v759
      %851 = vst.msk [vmem:[%s145 + $0x198] sm:$0xff] %vm799, %v762
      %852 = vst.msk [vmem:[%s145 + $0x1a0] sm:$0xff] %vm799, %v765
      %853 = vst.msk [vmem:[%s145 + $0x1a8] sm:$0xff] %vm799, %v768
      %854 = vst.msk [vmem:[%s145 + $0x1b0] sm:$0xff] %vm799, %v771
      %855 = vst.msk [vmem:[%s145 + $0x1b8] sm:$0xff] %vm799, %v774
      %856 = vst.msk [vmem:[%s145 + $0x1c0] sm:$0xff] %vm799, %v777
      %857 = vst.msk [vmem:[%s145 + $0x1c8] sm:$0xff] %vm799, %v780
      %858 = vst.msk [vmem:[%s145 + $0x1d0] sm:$0xff] %vm799, %v783
      %859 = vst.msk [vmem:[%s145 + $0x1d8] sm:$0xff] %vm799, %v786
      %860 = vst.msk [vmem:[%s145 + $0x1e0] sm:$0xff] %vm799, %v789
      %861 = vst.msk [vmem:[%s145 + $0x1e8] sm:$0xff] %vm799, %v792
      %862 = vst.msk [vmem:[%s145 + $0x1f0] sm:$0xff] %vm799, %v795
      %863 = vst.msk [vmem:[%s145 + $0x1f8] sm:$0xff] %vm799, %v798
      %s864 = smul.u32 64, %s13
      %p865 = scmp.lt.s32.totalorder %s864, 255
      %s866 = scalar_select %p865, %s864, 255
      %s867 = smul.addr %s866, 8
      %s868 = scalar_lea.vmem %s2, %s867
      // Predicated region
      $region29: #{decode_layer.1} parent=27 // pred_check
        %p869 = pneg %p78
      $region30: #{decode_layer.1} parent=27 // pred_check_branch
        %871 = sbr.rel (%p869) target = $region32
      $region31: #{decode_layer.1} parent=27 // pred_region
        %s872 = smul.u32 64, %s13
      $region32: #{decode_layer.1} parent=27 // pred_fallthru
        _
    $region28: #{decode_layer.1} parent=5 // pred_fallthru
      _
    %p873 = scmp.le.s32.totalorder 2, %s8
    // Predicated region
    $region33: #{decode_layer.1} parent=5 // pred_check
      %p874 = pneg %p873
    $region34: #{decode_layer.1} parent=5 // pred_check_branch
      %876 = sbr.rel (%p874) target = $region36
    $region35: #{decode_layer.1} parent=5 // pred_region
      %s877 = ssub.s32 %s8, 2
      // Predicated region
      $region37: #{decode_layer.1} parent=35 // pred_check
        %p878 = pneg %p84
      $region38: #{decode_layer.1} parent=35 // pred_check_branch
        %880 = sbr.rel (%p878) target = $region40
      $region39: #{decode_layer.1} parent=35 // pred_region
        %s881 = smul.u32 64, %s14
        %p882 = scmp.lt.s32.totalorder %s881, 255
        %s883 = scalar_select %p882, %s881, 255
        %s884 = smul.addr %s883, 8
        %s885 = scalar_lea.vmem %s2, %s884
      $region40: #{decode_layer.1} parent=35 // pred_fallthru
        _
    $region36: #{decode_layer.1} parent=5 // pred_fallthru
      _
  $region6: #{decode_layer.1} parent=0 // loop_footer
    %s12 = sadd.s32 1, %s8
  $region7: #{decode_layer.1} parent=0 // loop_footer_branch
    %7 = sbr.rel target = $region3
  $region8: #{decode_layer.1} parent=0 // loop_exit
    _

</llo_original>
